<compile_context>
chip_gen: v5e
topology: v5e:2x2
jax: 0.10.0
libtpu: 0.0.40
codegen_flags: <defaults>
</compile_context>

<pallas_src>
import functools

import jax
import jax.numpy as jnp
from jax import lax
from jax.experimental import pallas as pl
from jax.experimental.pallas import tpu as pltpu


def _linear_kernel(x_ref, w_ref, b_ref, o_ref):
    # y = x @ w.T + b. Contract Cin (last dim) of both operands so neither
    # needs a data-movement transpose before hitting the MXU.
    acc = lax.dot_general(
        x_ref[...],
        w_ref[...],
        dimension_numbers=(((1,), (1,)), ((), ())),
        preferred_element_type=jnp.float32,
    )
    o_ref[...] = (acc + b_ref[...]).astype(o_ref.dtype)


@functools.partial(jax.jit, static_argnames=("block_b",))
def dummy_model_forward(x, weight, bias, block_b=1024):
    """Equivalent of DummyModel.forward (nn.Linear): y = x @ weight.T + bias.

    x:      [B, Cin]     float32
    weight: [Cout, Cin]  (PyTorch convention, NOT transposed on the host)
    bias:   [Cout]
    """
    B, Cin = x.shape
    Cout = weight.shape[0]
    b2 = bias.reshape(1, Cout)  # 2-D for TPU layout; fused under jit.

    flops = 2 * B * Cin * Cout
    bytes_accessed = (B * Cin + Cout * Cin + Cout + B * Cout) * x.dtype.itemsize
    cost = pl.CostEstimate(flops=flops, transcendentals=0,
                           bytes_accessed=bytes_accessed)

    if B <= block_b:
        # Small batch: no grid, single kernel invocation, everything in VMEM.
        return pl.pallas_call(
            _linear_kernel,
            out_shape=jax.ShapeDtypeStruct((B, Cout), x.dtype),
            in_specs=[
                pl.BlockSpec(memory_space=pltpu.MemorySpace.VMEM),
                pl.BlockSpec(memory_space=pltpu.MemorySpace.VMEM),
                pl.BlockSpec(memory_space=pltpu.MemorySpace.VMEM),
            ],
            out_specs=pl.BlockSpec(memory_space=pltpu.MemorySpace.VMEM),
            cost_estimate=cost,
        )(x, weight, b2)

    # Large batch: tile the batch axis, replicate weight/bias, shard across
    # TensorCores where available ("parallel").
    return pl.pallas_call(
        _linear_kernel,
        out_shape=jax.ShapeDtypeStruct((B, Cout), x.dtype),
        grid_spec=pltpu.PrefetchScalarGridSpec(
            num_scalar_prefetch=0,
            grid=(pl.cdiv(B, block_b),),
            in_specs=[
                pl.BlockSpec((block_b, Cin), lambda i: (i, 0)),
                pl.BlockSpec((Cout, Cin), lambda i: (0, 0)),
                pl.BlockSpec((1, Cout), lambda i: (0, 0)),
            ],
            out_specs=pl.BlockSpec((block_b, Cout), lambda i: (i, 0)),
        ),
        compiler_params=pltpu.CompilerParams(
            dimension_semantics=("parallel",),
        ),
        cost_estimate=cost,
    )(x, weight, b2)


if __name__ == "__main__":
    # Module defaults: in_channels=120, out_channels=2. Small batch of 8.
    in_channels, out_channels, batch = 120, 2, 8

    key = jax.random.PRNGKey(0)
    kx, kw, kb = jax.random.split(key, 3)

    # Deterministic parameter init (mimicking nn.Linear's uniform init range).
    bound = 1.0 / (in_channels ** 0.5)
    weight = jax.random.uniform(
        kw, (out_channels, in_channels), jnp.float32, -bound, bound
    )
    bias = jax.random.uniform(kb, (out_channels,), jnp.float32, -bound, bound)
    x = jax.random.normal(kx, (batch, in_channels), jnp.float32)

    y = dummy_model_forward(x, weight, bias)
    y = jax.block_until_ready(y)

    # Cross-check against plain-JAX reference.
    y_ref = x @ weight.T + bias
    assert y.shape == (batch, out_channels)
    assert jnp.allclose(y, y_ref, atol=1e-5, rtol=1e-5)

    print("KERNEL_OK")
</pallas_src>

<mosaic_0001>
module attributes {stable_mosaic.version = 11 : i64} {
  func.func @_linear_kernel(%arg0: memref<8x120xf32, #tpu.memory_space<vmem>>, %arg1: memref<2x120xf32, #tpu.memory_space<vmem>>, %arg2: memref<1x2xf32, #tpu.memory_space<vmem>>, %arg3: memref<8x2xf32, #tpu.memory_space<vmem>>) attributes {dimension_semantics = [], scalar_prefetch = 0 : i64, scratch_operands = 0 : i64, tpu.core_type = #tpu.core_type<tc>} {
    %c0 = arith.constant 0 : index
    %c0_0 = arith.constant 0 : index
    %0 = vector.load %arg0[%c0, %c0_0] : memref<8x120xf32, #tpu.memory_space<vmem>>, vector<8x120xf32>
    %c0_1 = arith.constant 0 : index
    %c0_2 = arith.constant 0 : index
    %1 = vector.load %arg1[%c0_1, %c0_2] : memref<2x120xf32, #tpu.memory_space<vmem>>, vector<2x120xf32>
    %cst = arith.constant dense<0.000000e+00> : vector<8x2xf32>
    %2 = tpu.matmul %0, %1, %cst {dimension_numbers = #tpu.dot_dimension_numbers<[1], [1], [0], [0], [0, 0, 1, 0], [], []>} : vector<8x120xf32>, vector<2x120xf32>, vector<8x2xf32> -> vector<8x2xf32>
    %c0_3 = arith.constant 0 : index
    %c0_4 = arith.constant 0 : index
    %3 = vector.load %arg2[%c0_3, %c0_4] : memref<1x2xf32, #tpu.memory_space<vmem>>, vector<1x2xf32>
    %4 = vector.broadcast %3 : vector<1x2xf32> to vector<8x2xf32>
    %5 = arith.addf %2, %4 : vector<8x2xf32>
    %c0_5 = arith.constant 0 : index
    %c0_6 = arith.constant 0 : index
    %6 = vector.load %arg3[%c0_5, %c0_6] : memref<8x2xf32, #tpu.memory_space<vmem>>, vector<8x2xf32>
    tpu.vector_store %arg3[%c0_5, %c0_6], %5 {strides = array<i32>} : memref<8x2xf32, #tpu.memory_space<vmem>>, vector<8x2xf32>,
    return
  }
}

</mosaic_0001>

<llo_original>
// kernel: dummy_model_forward.1
$region0: #{dummy_model_forward.1}
  #allocation0 [shape = 'u32[]', space=smem, size = 0x4, offset = 0x4, fixed_abs, tag = 'smem constant byte address 0x4 - core index']
  #allocation1 [shape = 'u32[72,128]{1,0:T(1,128)}', space=vmem, size = 0x9000, scoped, tag = 'internal scratch']
  %s0 = inlined_call_operand.hbm [shape: f32[8,120], index: 0, kind: input, shape index: {}]
  %s1 = inlined_call_operand.hbm [shape: f32[2,120], index: 1, kind: input, shape index: {}]
  %s2 = inlined_call_operand.vmem [shape: f32[1,2], index: 2, kind: input, shape index: {}]
  %s3 = inlined_call_operand.vmem [shape: f32[8,2], index: 3, kind: output, shape index: {}]
  %s4 = sld [smem:[#allocation0]]
  $region30: #{dummy_model_forward.1} parent=0
    _
  %s6 = ssub.s32 1, %s4
  %s7 = scalar_select 0, %s6, %s4
  $region1: #{dummy_model_forward.1} parent=0
    #allocation2 [shape = 'u8[4096]{0}', space=vmem, size = 0x1000, scoped, tag = 'input window, operand 0, single buffered']
    #allocation3 [shape = 's32[1]{0}', space=sflag, size = 0x4, scoped, tag = 'scoped memory for dummy_model_forward.1']
    #allocation4 [shape = 'u8[1024]{0}', space=vmem, size = 0x400, scoped, tag = 'input window, operand 1, single buffered']
    #allocation5 [shape = 's32[1]{0}', space=sflag, size = 0x4, scoped, tag = 'scoped memory for dummy_model_forward.1']
    %8 = vsyncpa [#allocation3], 0
    %9 = vsyncpa [#allocation5], 0
    // Predicated region
    $region2: #{dummy_model_forward.1} parent=1 // pred_check
      _
    $region3: #{dummy_model_forward.1} parent=1 // pred_check_branch
      %11 = sbr.rel (0) target = $region5
    $region4: #{dummy_model_forward.1} parent=1 // pred_region
      %13 = vsyncadd [#allocation3], 0
      %s15 = sshll.u32 %s0, 4
      %s16 = int_to_ptr.hbm [resolvable:$true] %s15
      %s17 = sshll.u32 [#allocation2], 4
      %s18 = int_to_ptr.vmem [resolvable:$true] %s17
      %20 = dma.hbm_to_vmem [thread:$0]  %s16, 128, %s18, [#allocation3]
    $region5: #{dummy_model_forward.1} parent=1 // pred_fallthru
      _
    // Predicated region
    $region6: #{dummy_model_forward.1} parent=1 // pred_check
      _
    $region7: #{dummy_model_forward.1} parent=1 // pred_check_branch
      %22 = sbr.rel (0) target = $region9
    $region8: #{dummy_model_forward.1} parent=1 // pred_region
      %24 = vsyncadd [#allocation5], 0
      %s26 = sshll.u32 %s1, 4
      %s27 = int_to_ptr.hbm [resolvable:$true] %s26
      %s28 = sshll.u32 [#allocation4], 4
      %s29 = int_to_ptr.vmem [resolvable:$true] %s28
      %31 = dma.hbm_to_vmem [thread:$0]  %s27, 32, %s29, [#allocation5]
    $region9: #{dummy_model_forward.1} parent=1 // pred_fallthru
      _
    // Predicated region
    $region10: #{dummy_model_forward.1} parent=1 // pred_check
      _
    $region11: #{dummy_model_forward.1} parent=1 // pred_check_branch
      %33 = sbr.rel (0) target = $region13
    $region12: #{dummy_model_forward.1} parent=1 // pred_region
      _
    $region13: #{dummy_model_forward.1} parent=1 // pred_fallthru
      _
    // Predicated region
    $region14: #{dummy_model_forward.1} parent=1 // pred_check
      _
    $region15: #{dummy_model_forward.1} parent=1 // pred_check_branch
      %35 = sbr.rel (0) target = $region17
    $region16: #{dummy_model_forward.1} parent=1 // pred_region
      %37 = dma.done [#allocation3], 128
    $region17: #{dummy_model_forward.1} parent=1 // pred_fallthru
      _
    // Predicated region
    $region18: #{dummy_model_forward.1} parent=1 // pred_check
      _
    $region19: #{dummy_model_forward.1} parent=1 // pred_check_branch
      %39 = sbr.rel (0) target = $region21
    $region20: #{dummy_model_forward.1} parent=1 // pred_region
      %41 = dma.done [#allocation5], 32
    $region21: #{dummy_model_forward.1} parent=1 // pred_fallthru
      _
    %v42 = vld [vmem:[#allocation2] sm:$0xff]
    %v43 = vld [vmem:[#allocation4] sm:$0x3]
    %v44 = vld [vmem:[%s2] sm:$0x1]
    %v46 = vperm.slane %v44, 0
    %vm48 = vcmask 982016
    %v50 = vsel %vm48, %v42, 0
    %v53 = vsel %vm48, %v43, 0
    %55 = vmatpush.xpose.msra.mxu0 0.0
    %56 = vmatpush.xpose.msra.mxu0 0.0
    %57 = vmatpush.xpose.msra.mxu0 0.0
    %58 = vmatpush.xpose.msra.mxu0 0.0
    %59 = vmatpush.xpose.msra.mxu0 0.0
    %60 = vmatpush.xpose.msra.mxu0 0.0
    %61 = vmatpush.xpose.msra.mxu0 0.0
    %62 = vmatpush.xpose.msra.mxu0 0.0
    %63 = vmatpush.xpose.msra.mxu0 0.0
    %64 = vmatpush.xpose.msra.mxu0 0.0
    %65 = vmatpush.xpose.msra.mxu0 0.0
    %66 = vmatpush.xpose.msra.mxu0 0.0
    %67 = vmatpush.xpose.msra.mxu0 0.0
    %68 = vmatpush.xpose.msra.mxu0 0.0
    %69 = vmatpush.xpose.msra.mxu0 0.0
    %70 = vmatpush.xpose.msra.mxu0 %v53
    %71 = vmatmul.f32.gmra.mxu0 %v50
    %v72 = vpop.f32.mrf.mxu0
    %v73 = vadd.f32 %v46, %v72
    %74 = vdwg.mxu0
    %vm75 = vcmask 15360
    %76 = vst.msk [vmem:[%s3] sm:$0xff] %vm75, %v73
    // Predicated region
    $region22: #{dummy_model_forward.1} parent=1 // pred_check
      _
    $region23: #{dummy_model_forward.1} parent=1 // pred_check_branch
      %78 = sbr.rel (0) target = $region25
    $region24: #{dummy_model_forward.1} parent=1 // pred_region
      _
    $region25: #{dummy_model_forward.1} parent=1 // pred_fallthru
      _
    // Predicated region
    $region26: #{dummy_model_forward.1} parent=1 // pred_check
      _
    $region27: #{dummy_model_forward.1} parent=1 // pred_check_branch
      %80 = sbr.rel (0) target = $region29
    $region28: #{dummy_model_forward.1} parent=1 // pred_region
      _
    $region29: #{dummy_model_forward.1} parent=1 // pred_fallthru
      _
    %81 = vsyncpa [#allocation3], 1
    %82 = vsyncpa [#allocation5], 1

</llo_original>
